<compile_context>
chip_gen: v7x
topology: tpu7x:2x2x1
jax: 0.10.0
libtpu: 0.0.40
codegen_flags: <defaults>
</compile_context>

<pallas_src>
import functools

import jax
import jax.numpy as jnp
from jax.experimental import pallas as pl
from jax.experimental.pallas import tpu as pltpu


_LANE = 128
_MIN_GRID_STEPS = 8          # keep both v7x TensorCores fed on the parallel axis
_MAX_TM = 8192               # sanity cap on the row tile


def _round_up(x, m):
    return ((x + m - 1) // m) * m


def _row_align(dtype):
    itemsize = jnp.dtype(dtype).itemsize
    return {4: 8, 2: 16, 1: 32}.get(itemsize, 8)


def _vmem_capacity_bytes():
    try:
        return int(pltpu.get_tpu_info().vmem_capacity_bytes)
    except Exception:
        return 64 * 1024 * 1024   # conservative fallback (v7x per-core VMEM)


@functools.lru_cache(maxsize=None)
def _single_buffer_weights_supported():
    """Probe once whether pipeline_mode=pl.Buffered(1) compiles and runs here."""
    try:
        def _probe_kernel(x_ref, w_ref, o_ref):
            o_ref[...] = x_ref[...] + w_ref[...]

        fn = pl.pallas_call(
            _probe_kernel,
            out_shape=jax.ShapeDtypeStruct((16, 128), jnp.float32),
            grid=(2,),
            in_specs=[
                pl.BlockSpec((8, 128), lambda i: (i, 0)),
                pl.BlockSpec((8, 128), lambda i: (0, 0),
                             pipeline_mode=pl.Buffered(1)),
            ],
            out_specs=pl.BlockSpec((8, 128), lambda i: (i, 0)),
        )
        out = fn(jnp.zeros((16, 128), jnp.float32),
                 jnp.ones((8, 128), jnp.float32))
        jax.block_until_ready(out)
        return True
    except Exception:
        return False


def _senet_kernel(x_ref, w1t_ref, w2t_ref, o_ref):
    # x_ref:   (tm, Cp)  row tile of the input (channels lane-dense)
    # w1t_ref: (Cp, Hp)  squeeze weight, pre-transposed (+ zero-padded if needed)
    # w2t_ref: (Hp, Cp)  excitation weight, pre-transposed (+ zero-padded if needed)
    x = x_ref[...]                               # native dtype, fed straight to the MXU

    # squeeze: (tm, Cp) @ (Cp, Hp) -> f32 accumulation, then ReLU
    h = jnp.dot(x, w1t_ref[...], preferred_element_type=jnp.float32)
    h = jnp.maximum(h, 0.0)

    # excitation: (tm, Hp) @ (Hp, Cp) -> f32, then sigmoid (EUP)
    g = jnp.dot(h.astype(w2t_ref.dtype), w2t_ref[...],
                preferred_element_type=jnp.float32)
    g = jax.nn.sigmoid(g)

    if x.dtype == jnp.float32:
        out = x * g                              # exact for f32 inputs
    else:
        out = x * g.astype(x.dtype)              # avoid a full (tm, Cp) f32 copy of x
    o_ref[...] = out.astype(o_ref.dtype)


@functools.partial(jax.jit, static_argnames=("tm",))
def senet_forward(x, w1, w2, *, tm=None):
    """x: (..., C);  w1: (C//r, C);  w2: (C, C//r)  -- PyTorch nn.Linear weight layout."""
    orig_shape = x.shape
    C = orig_shape[-1]
    H = w1.shape[0]
    x2d = x.reshape(-1, C)
    M = x2d.shape[0]

    itemsize = jnp.dtype(x.dtype).itemsize
    w_itemsize = jnp.dtype(w1.dtype).itemsize
    row_align = _row_align(x.dtype)

    # Lane-dense channel/hidden sizes.  Channel pad only triggers when C % 128 != 0;
    # the row dimension is never padded (ragged last tile is masked by Pallas).
    Cp = _round_up(C, _LANE)
    Hp = _round_up(H, _LANE)

    # Pre-transpose (+ zero-pad) the small weights once; padded rows/cols are exact
    # zeros, so they contribute nothing to either matmul.
    w1t = w1.T                                   # (C, H)
    w2t = w2.T                                   # (H, C)
    if Cp != C or Hp != H:
        w1t = jnp.pad(w1t, ((0, Cp - C), (0, Hp - H)))
        w2t = jnp.pad(w2t, ((0, Hp - H), (0, Cp - C)))
    if Cp != C:
        x2d = jnp.pad(x2d, ((0, 0), (0, Cp - C)))

    single_buffer = _single_buffer_weights_supported()

    # ---- generation-aware row-tile sizing --------------------------------------
    vmem_cap = _vmem_capacity_bytes()
    weight_bufs = 1 if single_buffer else 2
    weight_bytes = weight_bufs * 2 * Cp * Hp * w_itemsize
    # per-row VMEM: 2x double-buffered input + 2x output tiles (native dtype),
    # the f32 h/g intermediates, plus one live native-dtype copy of x.
    per_row = 4 * Cp * itemsize + 4 * (Cp + Hp) + Cp * itemsize
    budget = max(int(vmem_cap * 0.70) - weight_bytes, 2 * 1024 * 1024)

    if tm is None:
        tm = budget // per_row
    tm = max(row_align, (int(tm) // row_align) * row_align)   # sublane alignment
    tm = min(tm, _MAX_TM)
    # keep >= _MIN_GRID_STEPS tiles so the parallel axis feeds both v7x cores
    steps_cap = max(row_align, _round_up(-(-M // _MIN_GRID_STEPS), row_align))
    tm = min(tm, steps_cap)
    tm = min(tm, _round_up(M, row_align))       # never larger than the row count
    tm = max(tm, row_align)

    grid = (pl.cdiv(M, tm),)                    # ragged last row tile is masked

    weight_kwargs = {"pipeline_mode": pl.Buffered(1)} if single_buffer else {}
    vmem_limit = int(min(vmem_cap * 0.85, 110 * 1024 * 1024))

    out2d = pl.pallas_call(
        _senet_kernel,
        out_shape=jax.ShapeDtypeStruct((M, Cp), x.dtype),
        grid=grid,
        in_specs=[
            pl.BlockSpec((tm, Cp), lambda i: (i, 0)),                    # x row tile
            pl.BlockSpec((Cp, Hp), lambda i: (0, 0), **weight_kwargs),   # W1^T resident
            pl.BlockSpec((Hp, Cp), lambda i: (0, 0), **weight_kwargs),   # W2^T resident
        ],
        out_specs=pl.BlockSpec((tm, Cp), lambda i: (i, 0)),
        compiler_params=pltpu.CompilerParams(
            dimension_semantics=("parallel",),
            vmem_limit_bytes=vmem_limit,
        ),
    )(x2d, w1t, w2t)

    if Cp != C:
        out2d = out2d[:, :C]
    return out2d.reshape(orig_shape)


def senet_reference(x, w1, w2):
    """Pure-JAX reference mirroring the PyTorch forward."""
    g = jnp.maximum(x @ w1.T, 0.0)
    g = jax.nn.sigmoid(g @ w2.T)
    return x * g


if __name__ == "__main__":
    key = jax.random.PRNGKey(0)
    k_x, k_w1, k_w2 = jax.random.split(key, 3)

    # small shapes consistent with the module: batch=2, seq=8, channels=32, ratio=8
    B, S, C, ratio = 2, 8, 32, 8
    H = C // ratio

    x = jax.random.normal(k_x, (B, S, C), dtype=jnp.float32)
    # deterministic synthetic weights (PyTorch nn.Linear weight shapes, no bias)
    w1 = jax.random.normal(k_w1, (H, C), dtype=jnp.float32) * (1.0 / jnp.sqrt(C))
    w2 = jax.random.normal(k_w2, (C, H), dtype=jnp.float32) * (1.0 / jnp.sqrt(H))

    out = senet_forward(x, w1, w2)
    out = jax.block_until_ready(out)

    ref = senet_reference(x, w1, w2)
    assert out.shape == x.shape
    assert jnp.allclose(out, ref, atol=1e-5, rtol=1e-5), "mismatch vs reference"

    print("KERNEL_OK")
</pallas_src>

<mosaic_0001>
module attributes {stable_mosaic.version = 11 : i64} {
  func.func @_senet_kernel(%arg0: i32, %arg1: memref<8x128xf32, #tpu.memory_space<vmem>>, %arg2: memref<128x128xf32, #tpu.memory_space<vmem>>, %arg3: memref<128x128xf32, #tpu.memory_space<vmem>>, %arg4: memref<8x128xf32, #tpu.memory_space<vmem>>) attributes {dimension_semantics = [#tpu.dimension_semantics<parallel>], iteration_bounds = array<i64: 2>, scalar_prefetch = 0 : i64, scratch_operands = 0 : i64, tpu.core_type = #tpu.core_type<tc>, window_params = [{transform_indices = @transform_0, window_bounds = array<i64: 8, 128>}, {pipeline_mode = #tpu.pipeline_mode<synchronous>, transform_indices = @transform_1, window_bounds = array<i64: 128, 128>}, {pipeline_mode = #tpu.pipeline_mode<synchronous>, transform_indices = @transform_2, window_bounds = array<i64: 128, 128>}, {transform_indices = @transform_3, window_bounds = array<i64: 8, 128>}]} {
    %c0 = arith.constant 0 : index
    %c0_0 = arith.constant 0 : index
    %0 = vector.load %arg1[%c0, %c0_0] : memref<8x128xf32, #tpu.memory_space<vmem>>, vector<8x128xf32>
    %c0_1 = arith.constant 0 : index
    %c0_2 = arith.constant 0 : index
    %1 = vector.load %arg2[%c0_1, %c0_2] : memref<128x128xf32, #tpu.memory_space<vmem>>, vector<128x128xf32>
    %cst = arith.constant dense<0.000000e+00> : vector<8x128xf32>
    %2 = tpu.matmul %0, %1, %cst {dimension_numbers = #tpu.dot_dimension_numbers<[1], [0], [0], [1], [0, 0, 1, 1], [], []>} : vector<8x128xf32>, vector<128x128xf32>, vector<8x128xf32> -> vector<8x128xf32>
    %cst_3 = arith.constant 0.000000e+00 : f32
    %3 = vector.broadcast %cst_3 : f32 to vector<8x128xf32>
    %4 = arith.maximumf %2, %3 : vector<8x128xf32>
    %c0_4 = arith.constant 0 : index
    %c0_5 = arith.constant 0 : index
    %5 = vector.load %arg3[%c0_4, %c0_5] : memref<128x128xf32, #tpu.memory_space<vmem>>, vector<128x128xf32>
    %cst_6 = arith.constant dense<0.000000e+00> : vector<8x128xf32>
    %6 = tpu.matmul %4, %5, %cst_6 {dimension_numbers = #tpu.dot_dimension_numbers<[1], [0], [0], [1], [0, 0, 1, 1], [], []>} : vector<8x128xf32>, vector<128x128xf32>, vector<8x128xf32> -> vector<8x128xf32>
    %7 = arith.negf %6 : vector<8x128xf32>
    %8 = math.exp %7 : vector<8x128xf32>
    %cst_7 = arith.constant 1.000000e+00 : f32
    %9 = vector.broadcast %cst_7 : f32 to vector<8x128xf32>
    %10 = arith.addf %9, %8 : vector<8x128xf32>
    %11 = arith.divf %9, %10 : vector<8x128xf32>
    %12 = arith.mulf %0, %11 : vector<8x128xf32>
    %c0_8 = arith.constant 0 : index
    %c0_9 = arith.constant 0 : index
    %13 = vector.load %arg4[%c0_8, %c0_9] : memref<8x128xf32, #tpu.memory_space<vmem>>, vector<8x128xf32>
    tpu.vector_store %arg4[%c0_8, %c0_9], %12 {strides = array<i32>} : memref<8x128xf32, #tpu.memory_space<vmem>>, vector<8x128xf32>,
    return
  }
  func.func @transform_0(%arg0: i32) -> (i32, i32) {
    %c0_i32 = arith.constant 0 : i32
    %c0_i32_0 = arith.constant 0 : i32
    return %arg0, %c0_i32 : i32, i32
  }
  func.func @transform_1(%arg0: i32) -> (i32, i32) {
    %c0_i32 = arith.constant 0 : i32
    %c0_i32_0 = arith.constant 0 : i32
    %c0_i32_1 = arith.constant 0 : i32
    return %c0_i32, %c0_i32_0 : i32, i32
  }
  func.func @transform_2(%arg0: i32) -> (i32, i32) {
    %c0_i32 = arith.constant 0 : i32
    %c0_i32_0 = arith.constant 0 : i32
    %c0_i32_1 = arith.constant 0 : i32
    return %c0_i32, %c0_i32_0 : i32, i32
  }
  func.func @transform_3(%arg0: i32) -> (i32, i32) {
    %c0_i32 = arith.constant 0 : i32
    %c0_i32_0 = arith.constant 0 : i32
    return %arg0, %c0_i32 : i32, i32
  }
}

</mosaic_0001>

<llo_original>
// kernel: senet_forward.1
$region0: #{senet_forward.1}
  #allocation0 [shape = 'u32[]', space=smem, size = 0x4, offset = 0x4, fixed_abs, tag = 'smem constant byte address 0x4 - core index']
  #allocation1 [shape = 'u32[144,128]{1,0:T(1,128)}', space=vmem, size = 0x12000, scoped, tag = 'internal scratch']
  %s0 = inlined_call_operand.vmem [shape: f32[16,128], index: 0, kind: input, shape index: {}]
  %s1 = inlined_call_operand.vmem [shape: f32[128,128], index: 1, kind: input, shape index: {}]
  %s2 = inlined_call_operand.vmem [shape: f32[128,128], index: 2, kind: input, shape index: {}]
  %s3 = inlined_call_operand.vmem [shape: f32[16,128], index: 3, kind: output, shape index: {}]
  %s4 = sld [smem:[#allocation0]]
  $region45: #{senet_forward.1} parent=0
    _
  %s6 = ssub.s32 1, %s4
  %s7 = scalar_select 0, %s6, %s4
  loop: start=0, step=1, limit=4
  $region2: #{senet_forward.1} parent=0 // loop_pre_header
    _
  $region3: #{senet_forward.1} parent=0 // loop_header
    %s9 = sphi 0, %s13
    %p10 = scmp.ge.s32.totalorder %s9, 4
    %s19 = sphi 0, %s21
    %s22 = sphi 0, %s19
    %s23 = sphi 0, %s22
    %s39 = sphi 0, %s23
    %s43 = sphi 0, %s43
    %s45 = sphi 0, %s43
    %s46 = sphi 0, %s45
    %s60 = sphi 0, %s46
    %s64 = sphi 0, %s64
    %s66 = sphi 0, %s64
    %s67 = sphi 0, %s66
    %s81 = sphi 0, %s67
    %s87 = sphi 0, %s89
    %s90 = sphi 0, %s87
    %s91 = sphi 0, %s90
    %s107 = sphi 0, %s91
  $region4: #{senet_forward.1} parent=0 // loop_header_branch
    %12 = sbr.rel (%p10) target = $region8
  $region5: #{senet_forward.1} parent=0 // loop_body
    %s14 = ssub.s32 %s9, 1
    %s15 = ssub.s32 %s9, 2
    %s16 = sadd.s32 %s9, 1
    %s17 = ssub.s32 %s9, %s16
    %p18 = scmp.eq.s32.totalorder %s17, 0
    %s20 = sadd.s32 %s19, 1
    %s21 = scalar_select %p18, %s19, %s20
    %p24 = pneg %p18
    %p25 = scmp.eq.s32.totalorder %s9, 1
    %p26 = por %p24, %p25
    %p27 = scmp.ne.s32.totalorder %s19, %s22
    %p28 = scmp.eq.s32.totalorder %s9, 0
    %p29 = por %p27, %p28
    %p30 = scmp.ne.s32.totalorder %s19, %s22
    %p31 = scmp.eq.s32.totalorder %s14, 1
    %p32 = por %p30, %p31
    %p33 = scmp.ne.s32.totalorder %s22, %s23
    %p34 = scmp.eq.s32.totalorder %s14, 0
    %p35 = por %p33, %p34
    %p36 = scmp.ne.s32.totalorder %s22, %s23
    %p37 = scmp.eq.s32.totalorder %s15, 1
    %p38 = por %p36, %p37
    %p40 = scmp.ne.s32.totalorder %s23, %s39
    %p41 = scmp.eq.s32.totalorder %s15, 0
    %p42 = por %p40, %p41
    %s44 = sadd.s32 %s43, 1
    %p47 = scmp.eq.s32.totalorder %s9, 1
    %p48 = scmp.ne.s32.totalorder %s43, %s45
    %p49 = scmp.eq.s32.totalorder %s9, 0
    %p50 = por %p48, %p49
    %p51 = scmp.ne.s32.totalorder %s43, %s45
    %p52 = scmp.eq.s32.totalorder %s14, 1
    %p53 = por %p51, %p52
    %p54 = scmp.ne.s32.totalorder %s45, %s46
    %p55 = scmp.eq.s32.totalorder %s14, 0
    %p56 = por %p54, %p55
    %p57 = scmp.ne.s32.totalorder %s45, %s46
    %p58 = scmp.eq.s32.totalorder %s15, 1
    %p59 = por %p57, %p58
    %p61 = scmp.ne.s32.totalorder %s46, %s60
    %p62 = scmp.eq.s32.totalorder %s15, 0
    %p63 = por %p61, %p62
    %s65 = sadd.s32 %s64, 1
    %p68 = scmp.eq.s32.totalorder %s9, 1
    %p69 = scmp.ne.s32.totalorder %s64, %s66
    %p70 = scmp.eq.s32.totalorder %s9, 0
    %p71 = por %p69, %p70
    %p72 = scmp.ne.s32.totalorder %s64, %s66
    %p73 = scmp.eq.s32.totalorder %s14, 1
    %p74 = por %p72, %p73
    %p75 = scmp.ne.s32.totalorder %s66, %s67
    %p76 = scmp.eq.s32.totalorder %s14, 0
    %p77 = por %p75, %p76
    %p78 = scmp.ne.s32.totalorder %s66, %s67
    %p79 = scmp.eq.s32.totalorder %s15, 1
    %p80 = por %p78, %p79
    %p82 = scmp.ne.s32.totalorder %s67, %s81
    %p83 = scmp.eq.s32.totalorder %s15, 0
    %p84 = por %p82, %p83
    %s85 = ssub.s32 %s9, %s16
    %p86 = scmp.eq.s32.totalorder %s85, 0
    %s88 = sadd.s32 %s87, 1
    %s89 = scalar_select %p86, %s87, %s88
    %p92 = pneg %p86
    %p93 = scmp.eq.s32.totalorder %s9, 1
    %p94 = por %p92, %p93
    %p95 = scmp.ne.s32.totalorder %s87, %s90
    %p96 = scmp.eq.s32.totalorder %s9, 0
    %p97 = por %p95, %p96
    %p98 = scmp.ne.s32.totalorder %s87, %s90
    %p99 = scmp.eq.s32.totalorder %s14, 1
    %p100 = por %p98, %p99
    %p101 = scmp.ne.s32.totalorder %s90, %s91
    %p102 = scmp.eq.s32.totalorder %s14, 0
    %p103 = por %p101, %p102
    %p104 = scmp.ne.s32.totalorder %s90, %s91
    %p105 = scmp.eq.s32.totalorder %s15, 1
    %p106 = por %p104, %p105
    %p108 = scmp.ne.s32.totalorder %s91, %s107
    %p109 = scmp.eq.s32.totalorder %s15, 0
    %p110 = por %p108, %p109
    %p111 = scmp.le.s32.totalorder 1, %s9
    %p112 = scmp.lt.s32.totalorder %s9, 3
    %p113 = pnand %p111, %p112
    %p114 = pneg %p113
    // Predicated region
    $region9: #{senet_forward.1} parent=5 // pred_check
      _
    $region10: #{senet_forward.1} parent=5 // pred_check_branch
      %116 = sbr.rel (%p113) target = $region12
    $region11: #{senet_forward.1} parent=5 // pred_region
      %s117 = ssub.s32 %s9, 1
      // Predicated region
      $region13: #{senet_forward.1} parent=11 // pred_check
        %p118 = pneg %p56
      $region14: #{senet_forward.1} parent=11 // pred_check_branch
        %120 = sbr.rel (%p118) target = $region16
      $region15: #{senet_forward.1} parent=11 // pred_region
        _
      $region16: #{senet_forward.1} parent=11 // pred_fallthru
        _
      // Predicated region
      $region17: #{senet_forward.1} parent=11 // pred_check
        %p121 = pneg %p77
      $region18: #{senet_forward.1} parent=11 // pred_check_branch
        %123 = sbr.rel (%p121) target = $region20
      $region19: #{senet_forward.1} parent=11 // pred_region
        _
      $region20: #{senet_forward.1} parent=11 // pred_fallthru
        _
    $region12: #{senet_forward.1} parent=5 // pred_fallthru
      _
    %p124 = scmp.lt.s32.totalorder %s9, 2
    // Predicated region
    $region21: #{senet_forward.1} parent=5 // pred_check
      %p125 = pneg %p124
    $region22: #{senet_forward.1} parent=5 // pred_check_branch
      %127 = sbr.rel (%p125) target = $region24
    $region23: #{senet_forward.1} parent=5 // pred_region
      // Predicated region
      $region25: #{senet_forward.1} parent=23 // pred_check
        %p128 = pneg %p29
      $region26: #{senet_forward.1} parent=23 // pred_check_branch
        %130 = sbr.rel (%p128) target = $region28
      $region27: #{senet_forward.1} parent=23 // pred_region
        %p131 = scmp.lt.s32.totalorder %s9, 1
        %s132 = scalar_select %p131, %s9, 1
        %s133 = smul.addr %s132, 8
        %s134 = scalar_lea.vmem %s0, %s133
      $region28: #{senet_forward.1} parent=23 // pred_fallthru
        _
    $region24: #{senet_forward.1} parent=5 // pred_fallthru
      _
    %p135 = scmp.le.s32.totalorder 1, %s9
    %p136 = scmp.lt.s32.totalorder %s9, 3
    %p137 = pnand %p135, %p136
    %p138 = pneg %p137
    // Predicated region
    $region29: #{senet_forward.1} parent=5 // pred_check
      _
    $region30: #{senet_forward.1} parent=5 // pred_check_branch
      %140 = sbr.rel (%p137) target = $region32
    $region31: #{senet_forward.1} parent=5 // pred_region
      %s141 = ssub.s32 %s9, 1
      %p142 = scmp.lt.s32.totalorder %s14, 1
      %s143 = scalar_select %p142, %s14, 1
      %s144 = smul.addr %s143, 8
      %s145 = scalar_lea.vmem %s0, %s144
      %p146 = pneg %p35
      %p147 = pneg %p32
      %p148 = pneg %p56
      %p149 = pneg %p53
      %p150 = pneg %p77
      %p151 = pneg %p74
      %p152 = pneg %p103
      %p153 = pneg %p100
      %p154 = scmp.lt.s32.totalorder %s14, 1
      %s155 = scalar_select %p154, %s14, 1
      %s156 = smul.addr %s155, 8
      %s157 = scalar_lea.vmem %s3, %s156
      %p158 = scmp.lt.s32.totalorder %s14, 1
      %s159 = scalar_select %p158, %s14, 1
      %s160 = smul.addr %s159, 8
      %s161 = scalar_lea.vmem %s0, %s160
      %p162 = scmp.lt.s32.totalorder %s14, 1
      %s163 = scalar_select %p162, %s14, 1
      %s164 = smul.addr %s163, 8
      %s165 = scalar_lea.vmem %s3, %s164
      %v166 = vld [vmem:[%s161] sm:$0xff]
      %v167 = vld [vmem:[%s1] sm:$0xff]
      %v168 = vld [vmem:[%s1 + $0x8] sm:$0xff]
      %v169 = vld [vmem:[%s1 + $0x10] sm:$0xff]
      %v170 = vld [vmem:[%s1 + $0x18] sm:$0xff]
      %v171 = vld [vmem:[%s1 + $0x20] sm:$0xff]
      %v172 = vld [vmem:[%s1 + $0x28] sm:$0xff]
      %v173 = vld [vmem:[%s1 + $0x30] sm:$0xff]
      %v174 = vld [vmem:[%s1 + $0x38] sm:$0xff]
      %v175 = vld [vmem:[%s1 + $0x40] sm:$0xff]
      %v176 = vld [vmem:[%s1 + $0x48] sm:$0xff]
      %v177 = vld [vmem:[%s1 + $0x50] sm:$0xff]
      %v178 = vld [vmem:[%s1 + $0x58] sm:$0xff]
      %v179 = vld [vmem:[%s1 + $0x60] sm:$0xff]
      %v180 = vld [vmem:[%s1 + $0x68] sm:$0xff]
      %v181 = vld [vmem:[%s1 + $0x70] sm:$0xff]
      %v182 = vld [vmem:[%s1 + $0x78] sm:$0xff]
      %183 = vmatprep.subr.mxu0 0.0
      %184 = vmatpush1.msra.mxu0 %v167
      %185 = vmatprep.subr.mxu0 0.0
      %186 = vmatpush1.msra.mxu0 %v168
      %187 = vmatprep.subr.mxu0 0.0
      %188 = vmatpush1.msra.mxu0 %v169
      %189 = vmatprep.subr.mxu0 0.0
      %190 = vmatpush1.msra.mxu0 %v170
      %191 = vmatprep.subr.mxu0 0.0
      %192 = vmatpush1.msra.mxu0 %v171
      %193 = vmatprep.subr.mxu0 0.0
      %194 = vmatpush1.msra.mxu0 %v172
      %195 = vmatprep.subr.mxu0 0.0
      %196 = vmatpush1.msra.mxu0 %v173
      %197 = vmatprep.subr.mxu0 0.0
      %198 = vmatpush1.msra.mxu0 %v174
      %199 = vmatprep.subr.mxu0 0.0
      %200 = vmatpush1.msra.mxu0 %v175
      %201 = vmatprep.subr.mxu0 0.0
      %202 = vmatpush1.msra.mxu0 %v176
      %203 = vmatprep.subr.mxu0 0.0
      %204 = vmatpush1.msra.mxu0 %v177
      %205 = vmatprep.subr.mxu0 0.0
      %206 = vmatpush1.msra.mxu0 %v178
      %207 = vmatprep.subr.mxu0 0.0
      %208 = vmatpush1.msra.mxu0 %v179
      %209 = vmatprep.subr.mxu0 0.0
      %210 = vmatpush1.msra.mxu0 %v180
      %211 = vmatprep.subr.mxu0 0.0
      %212 = vmatpush1.msra.mxu0 %v181
      %213 = vmatprep.subr.mxu0 0.0
      %214 = vmatpush1.msra.mxu0 %v182
      %215 = vmatprep.subr.mxu0 0.0
      %216 = vmatpush1.msra.mxu0 0.0
      %217 = vmatprep.subr.mxu0 0.0
      %218 = vmatpush1.msra.mxu0 0.0
      %219 = vmatprep.subr.mxu0 0.0
      %220 = vmatpush1.msra.mxu0 0.0
      %221 = vmatprep.subr.mxu0 0.0
      %222 = vmatpush1.msra.mxu0 0.0
      %223 = vmatprep.subr.mxu0 0.0
      %224 = vmatpush1.msra.mxu0 0.0
      %225 = vmatprep.subr.mxu0 0.0
      %226 = vmatpush1.msra.mxu0 0.0
      %227 = vmatprep.subr.mxu0 0.0
      %228 = vmatpush1.msra.mxu0 0.0
      %229 = vmatprep.subr.mxu0 0.0
      %230 = vmatpush1.msra.mxu0 0.0
      %231 = vmatprep.subr.mxu0 0.0
      %232 = vmatpush1.msra.mxu0 0.0
      %233 = vmatprep.subr.mxu0 0.0
      %234 = vmatpush1.msra.mxu0 0.0
      %235 = vmatprep.subr.mxu0 0.0
      %236 = vmatpush1.msra.mxu0 0.0
      %237 = vmatprep.subr.mxu0 0.0
      %238 = vmatpush1.msra.mxu0 0.0
      %239 = vmatprep.subr.mxu0 0.0
      %240 = vmatpush1.msra.mxu0 0.0
      %241 = vmatprep.subr.mxu0 0.0
      %242 = vmatpush1.msra.mxu0 0.0
      %243 = vmatprep.subr.mxu0 0.0
      %244 = vmatpush1.msra.mxu0 0.0
      %245 = vmatprep.subr.mxu0 0.0
      %246 = vmatpush1.msra.mxu0 0.0
      %247 = vmatprep.mubr.f32.mxu0 0.0
      %248 = vmatmul.mubr.f32.gmra.mrb[0].mxu0 %v166
      %v249 = vpop.f32.mrb[0].mxu0
      %v250 = vadd.f32 0.0, %v249
      %v251 = vpop.f32.mrb[0].mxu0
      %252 = vdwg.mxu0
      %v253 = vmax.f32 %v250, 0.0
      %v254 = vld [vmem:[%s2] sm:$0xff]
      %v255 = vld [vmem:[%s2 + $0x8] sm:$0xff]
      %v256 = vld [vmem:[%s2 + $0x10] sm:$0xff]
      %v257 = vld [vmem:[%s2 + $0x18] sm:$0xff]
      %v258 = vld [vmem:[%s2 + $0x20] sm:$0xff]
      %v259 = vld [vmem:[%s2 + $0x28] sm:$0xff]
      %v260 = vld [vmem:[%s2 + $0x30] sm:$0xff]
      %v261 = vld [vmem:[%s2 + $0x38] sm:$0xff]
      %v262 = vld [vmem:[%s2 + $0x40] sm:$0xff]
      %v263 = vld [vmem:[%s2 + $0x48] sm:$0xff]
      %v264 = vld [vmem:[%s2 + $0x50] sm:$0xff]
      %v265 = vld [vmem:[%s2 + $0x58] sm:$0xff]
      %v266 = vld [vmem:[%s2 + $0x60] sm:$0xff]
      %v267 = vld [vmem:[%s2 + $0x68] sm:$0xff]
      %v268 = vld [vmem:[%s2 + $0x70] sm:$0xff]
      %v269 = vld [vmem:[%s2 + $0x78] sm:$0xff]
      %270 = vmatprep.subr.mxu0 0.0
      %271 = vmatpush1.msra.mxu0 %v254
      %272 = vmatprep.subr.mxu0 0.0
      %273 = vmatpush1.msra.mxu0 %v255
      %274 = vmatprep.subr.mxu0 0.0
      %275 = vmatpush1.msra.mxu0 %v256
      %276 = vmatprep.subr.mxu0 0.0
      %277 = vmatpush1.msra.mxu0 %v257
      %278 = vmatprep.subr.mxu0 0.0
      %279 = vmatpush1.msra.mxu0 %v258
      %280 = vmatprep.subr.mxu0 0.0
      %281 = vmatpush1.msra.mxu0 %v259
      %282 = vmatprep.subr.mxu0 0.0
      %283 = vmatpush1.msra.mxu0 %v260
      %284 = vmatprep.subr.mxu0 0.0
      %285 = vmatpush1.msra.mxu0 %v261
      %286 = vmatprep.subr.mxu0 0.0
      %287 = vmatpush1.msra.mxu0 %v262
      %288 = vmatprep.subr.mxu0 0.0
      %289 = vmatpush1.msra.mxu0 %v263
      %290 = vmatprep.subr.mxu0 0.0
      %291 = vmatpush1.msra.mxu0 %v264
      %292 = vmatprep.subr.mxu0 0.0
      %293 = vmatpush1.msra.mxu0 %v265
      %294 = vmatprep.subr.mxu0 0.0
      %295 = vmatpush1.msra.mxu0 %v266
      %296 = vmatprep.subr.mxu0 0.0
      %297 = vmatpush1.msra.mxu0 %v267
      %298 = vmatprep.subr.mxu0 0.0
      %299 = vmatpush1.msra.mxu0 %v268
      %300 = vmatprep.subr.mxu0 0.0
      %301 = vmatpush1.msra.mxu0 %v269
      %302 = vmatprep.subr.mxu0 0.0
      %303 = vmatpush1.msra.mxu0 0.0
      %304 = vmatprep.subr.mxu0 0.0
      %305 = vmatpush1.msra.mxu0 0.0
      %306 = vmatprep.subr.mxu0 0.0
      %307 = vmatpush1.msra.mxu0 0.0
      %308 = vmatprep.subr.mxu0 0.0
      %309 = vmatpush1.msra.mxu0 0.0
      %310 = vmatprep.subr.mxu0 0.0
      %311 = vmatpush1.msra.mxu0 0.0
      %312 = vmatprep.subr.mxu0 0.0
      %313 = vmatpush1.msra.mxu0 0.0
      %314 = vmatprep.subr.mxu0 0.0
      %315 = vmatpush1.msra.mxu0 0.0
      %316 = vmatprep.subr.mxu0 0.0
      %317 = vmatpush1.msra.mxu0 0.0
      %318 = vmatprep.subr.mxu0 0.0
      %319 = vmatpush1.msra.mxu0 0.0
      %320 = vmatprep.subr.mxu0 0.0
      %321 = vmatpush1.msra.mxu0 0.0
      %322 = vmatprep.subr.mxu0 0.0
      %323 = vmatpush1.msra.mxu0 0.0
      %324 = vmatprep.subr.mxu0 0.0
      %325 = vmatpush1.msra.mxu0 0.0
      %326 = vmatprep.subr.mxu0 0.0
      %327 = vmatpush1.msra.mxu0 0.0
      %328 = vmatprep.subr.mxu0 0.0
      %329 = vmatpush1.msra.mxu0 0.0
      %330 = vmatprep.subr.mxu0 0.0
      %331 = vmatpush1.msra.mxu0 0.0
      %332 = vmatprep.subr.mxu0 0.0
      %333 = vmatpush1.msra.mxu0 0.0
      %334 = vmatprep.mubr.f32.mxu0 0.0
      %335 = vmatmul.mubr.f32.gmra.mrb[0].mxu0 %v253
      %v336 = vpop.f32.mrb[0].mxu0
      %v337 = vadd.f32 0.0, %v336
      %v338 = vpop.f32.mrb[0].mxu0
      %339 = vdwg.mxu0
      %v340 = vxor.u32 %v337, 2147483648
      %v341 = vmul.f32 %v340, 1.442695
      %v342 = vpow.pop %v341
      %v343 = vadd.f32 %v342, 1.0
      %v344 = vrcp.pop %v343
      %v345 = vmul.f32 1.0, %v344
      %v346 = vmul.f32 %v166, %v345
      %347 = vst [vmem:[%s165] sm:$0xff] %v346
      %p348 = scmp.lt.s32.totalorder %s14, 1
      %s349 = scalar_select %p348, %s14, 1
      %s350 = smul.addr %s349, 8
      %s351 = scalar_lea.vmem %s3, %s350
      // Predicated region
      $region33: #{senet_forward.1} parent=31 // pred_check
        %p352 = pneg %p100
      $region34: #{senet_forward.1} parent=31 // pred_check_branch
        %354 = sbr.rel (%p352) target = $region36
      $region35: #{senet_forward.1} parent=31 // pred_region
        _
      $region36: #{senet_forward.1} parent=31 // pred_fallthru
        _
    $region32: #{senet_forward.1} parent=5 // pred_fallthru
      _
    %p355 = scmp.le.s32.totalorder 2, %s9
    // Predicated region
    $region37: #{senet_forward.1} parent=5 // pred_check
      %p356 = pneg %p355
    $region38: #{senet_forward.1} parent=5 // pred_check_branch
      %358 = sbr.rel (%p356) target = $region40
    $region39: #{senet_forward.1} parent=5 // pred_region
      %s359 = ssub.s32 %s9, 2
      // Predicated region
      $region41: #{senet_forward.1} parent=39 // pred_check
        %p360 = pneg %p106
      $region42: #{senet_forward.1} parent=39 // pred_check_branch
        %362 = sbr.rel (%p360) target = $region44
      $region43: #{senet_forward.1} parent=39 // pred_region
        %p363 = scmp.lt.s32.totalorder %s15, 1
        %s364 = scalar_select %p363, %s15, 1
        %s365 = smul.addr %s364, 8
        %s366 = scalar_lea.vmem %s3, %s365
      $region44: #{senet_forward.1} parent=39 // pred_fallthru
        _
    $region40: #{senet_forward.1} parent=5 // pred_fallthru
      _
  $region6: #{senet_forward.1} parent=0 // loop_footer
    %s13 = sadd.s32 1, %s9
  $region7: #{senet_forward.1} parent=0 // loop_footer_branch
    %8 = sbr.rel target = $region3
  $region8: #{senet_forward.1} parent=0 // loop_exit
    _

</llo_original>
